<compile_context>
chip_gen: v5e
topology: v5e:2x2
jax: 0.10.0
libtpu: 0.0.40
codegen_flags: <defaults>
</compile_context>

<pallas_src>
import math
import functools
from typing import NamedTuple

import jax
import jax.numpy as jnp
from jax import lax
from jax.experimental import pallas as pl
from jax.experimental.pallas import tpu as pltpu


def _round_up(x, n):
    return ((x + n - 1) // n) * n


def _chip_info():
    """Returns (num_tensorcores_per_chip, scoped VMEM limit with ~25% headroom)."""
    vmem_cap = None
    try:
        info = pltpu.get_tpu_info()
        vmem_cap = int(getattr(info, "vmem_capacity_bytes", 0)) or None
    except Exception:
        vmem_cap = None
    kind = ""
    try:
        kind = jax.devices()[0].device_kind.lower()
    except Exception:
        kind = ""
    multi_tc = any(tag in kind for tag in ("v7", "v4", "v5p"))
    if vmem_cap is None:
        vmem_cap = (64 << 20) if "v7" in kind else (128 << 20)
    vmem_limit = max(16 << 20, int(vmem_cap * 3 // 4))  # leave ~25% headroom
    num_tc = 2 if multi_tc else 1
    return num_tc, vmem_limit


def _choose_tc(C, D, itemsize, num_tc, vmem_limit, tc_request):
    """Class-tile width: big (lane-dense, amortizes per-step overhead) but VMEM-safe,
    and split into >=2 steps per TensorCore only on multi-TC chips."""
    c128 = _round_up(C, 128)
    tc_eff = max(128, min(int(tc_request), c128))
    # Per class-column cost: double-buffered weight tile + double-buffered f32
    # output tile (batch bounded generously); keep slack for compiler scratch.
    slack = 6 << 20
    batch_bound = 256
    per_col = 2 * D * itemsize + 2 * batch_bound * 4
    tc_budget = max(128, ((vmem_limit - slack) // max(per_col, 1)) // 128 * 128)
    tc_eff = min(tc_eff, tc_budget, c128)
    if num_tc > 1:
        # Keep >=2 grid steps per TensorCore so both cores get warm DMA pipelines.
        target_steps = 2 * num_tc
        if pl.cdiv(C, tc_eff) < target_steps and C > 128 * target_steps:
            tc_eff = max(128, _round_up(pl.cdiv(C, target_steps), 128))
    return int(tc_eff)


class ArcFacePreparedWeight(NamedTuple):
    w_t: jax.Array        # (D, c_pad): row-normalized, transposed, compute dtype
    num_classes: int
    tc: int
    num_tc: int
    vmem_limit: int


def prepare_arcface_weight(weight, *, compute_dtype=jnp.bfloat16, tc=512):
    """Build the reusable weight operand once (F.normalize in f32, then cast/transpose/pad)."""
    C, D = weight.shape
    num_tc, vmem_limit = _chip_info()
    itemsize = jnp.dtype(compute_dtype).itemsize
    tc_eff = _choose_tc(C, D, itemsize, num_tc, vmem_limit, tc)
    c_pad = _round_up(C, tc_eff)

    # F.normalize(weight, dim=1) in f32 BEFORE the narrow cast (matches the
    # reference's normalize-then-use order), then K-major transpose + zero-pad.
    w32 = weight.astype(jnp.float32)
    w_norm = w32 * lax.rsqrt(jnp.maximum(jnp.sum(w32 * w32, axis=1, keepdims=True), 1e-24))
    w_t = jnp.transpose(w_norm).astype(compute_dtype)          # (D, C)
    if c_pad != C:
        w_t = jnp.pad(w_t, ((0, 0), (0, c_pad - C)))           # zero cols -> cos = 0
    return ArcFacePreparedWeight(w_t, int(C), tc_eff, num_tc, int(vmem_limit))


def _arcface_kernel(xn_ref, wt_ref, lab_ref, out_ref, *, s, cos_m, sin_m, th, mm, tc):
    """One class tile: cosine matmul (bf16/f32 MXU, f32 acc) + per-row margin select."""
    j = pl.program_id(0)

    x_n = xn_ref[...]                                   # (B, D), L2-normalized
    w_n = wt_ref[...]                                   # (D, tc), pre-normalized
    lab = lab_ref[...]                                  # (B, 1) int32

    # cos_th = x_n @ w_n : contraction over D with a K-major RHS.
    cos_th = lax.dot_general(
        x_n, w_n,
        dimension_numbers=(((1,), (0,)), ((), ())),
        preferred_element_type=jnp.float32,
    )                                                    # (B, tc) f32
    cos_th = jnp.clip(cos_th, -1.0, 1.0)

    b, tcols = cos_th.shape
    col_ids = lax.broadcasted_iota(jnp.int32, (b, tcols), 1) + j * tc
    one_hot = lab == col_ids                             # (B, tc) bool

    # ArcFace margin only affects each row's label column, so compute it on the
    # gathered (B, 1) target cosine (one lane-reduce + B-element EUP/VPU work)
    # instead of over the whole tile.  Rows whose label is outside this tile
    # get tgt = 0; the margin value is never selected for them.
    tgt = jnp.sum(jnp.where(one_hot, cos_th, 0.0), axis=1, keepdims=True)   # (B, 1)
    sin_t = jnp.sqrt(jnp.maximum(1.0 - tgt * tgt, 0.0))
    tgt_m = tgt * cos_m - sin_t * sin_m
    # torch.where(cos_th > th, cos_th_m, cos_th - mm); the module's subsequent
    # masked assignment with (cos_th - th) <= 0 is redundant with it.
    tgt_m = jnp.where(tgt > th, tgt_m, tgt - mm)

    out_ref[...] = (jnp.where(one_hot, tgt_m, cos_th) * s).astype(out_ref.dtype)


def arcface_forward(x, labels, prepared: ArcFacePreparedWeight, *, s=10.0, m=0.2):
    """x: [B, D], labels: [B] int, prepared: from prepare_arcface_weight -> [B, C] f32."""
    B, D = x.shape
    w_t = prepared.w_t
    assert w_t.shape[0] == D, "feature dim mismatch"
    C = prepared.num_classes
    tc_eff = prepared.tc
    c_pad = w_t.shape[1]
    grid = c_pad // tc_eff
    compute_dtype = w_t.dtype

    # Normalize x once in f32 (F.normalize semantics), stream it in compute dtype.
    x32 = x.astype(jnp.float32)
    x_n = x32 * lax.rsqrt(jnp.maximum(jnp.sum(x32 * x32, axis=1, keepdims=True), 1e-24))
    x_n = x_n.astype(compute_dtype)

    # Labels assumed in [0, C); out-of-range labels simply select no column
    # (the PyTorch scatter_ would error instead).
    labels2d = labels.astype(jnp.int32).reshape(B, 1)

    cos_m = math.cos(m)
    sin_m = math.sin(m)
    th = math.cos(math.pi - m)
    mm = math.sin(math.pi - m) * m

    kernel = functools.partial(
        _arcface_kernel, s=float(s), cos_m=cos_m, sin_m=sin_m, th=th, mm=mm, tc=tc_eff
    )

    itemsize = jnp.dtype(compute_dtype).itemsize
    cost = pl.CostEstimate(
        flops=2 * B * c_pad * D,
        transcendentals=B * grid + B,                    # per-tile (B,1) sqrt + x rsqrt
        bytes_accessed=D * c_pad * itemsize + B * D * itemsize + B * c_pad * 4 + B * 4,
    )

    out = pl.pallas_call(
        kernel,
        out_shape=jax.ShapeDtypeStruct((B, c_pad), jnp.float32),
        grid_spec=pltpu.PrefetchScalarGridSpec(
            num_scalar_prefetch=0,
            grid=(grid,),
            in_specs=[
                pl.BlockSpec((B, D), lambda j: (0, 0)),          # x_n, resident
                pl.BlockSpec((D, tc_eff), lambda j: (0, j)),     # weight tile (K-major)
                pl.BlockSpec((B, 1), lambda j: (0, 0)),          # labels
            ],
            out_specs=pl.BlockSpec((B, tc_eff), lambda j: (0, j)),
        ),
        compiler_params=pltpu.CompilerParams(
            dimension_semantics=("parallel",),                   # class axis -> TC split
            vmem_limit_bytes=int(prepared.vmem_limit),
        ),
        cost_estimate=cost,
    )(x_n, w_t, labels2d)

    return out[:, :C] if c_pad != C else out


def arcface_forward_from_weight(x, weight, labels, *, s=10.0, m=0.2,
                                compute_dtype=jnp.bfloat16, tc=512):
    """Convenience one-shot path (prepares the weight internally; prefer caching)."""
    prepared = prepare_arcface_weight(weight, compute_dtype=compute_dtype, tc=tc)
    return arcface_forward(x, labels, prepared, s=s, m=m)


def arcface_reference(x, weight, labels, *, s=10.0, m=0.2):
    """Pure-JAX f32 reference replicating the PyTorch forward."""
    cos_m, sin_m = math.cos(m), math.sin(m)
    th, mm = math.cos(math.pi - m), math.sin(math.pi - m) * m
    x_n = x / jnp.maximum(jnp.linalg.norm(x, axis=1, keepdims=True), 1e-12)
    w_n = weight / jnp.maximum(jnp.linalg.norm(weight, axis=1, keepdims=True), 1e-12)
    cos_th = jnp.clip(x_n @ w_n.T, -1.0, 1.0)
    sin_th = jnp.sqrt(1.0 - cos_th**2)
    cos_th_m = cos_th * cos_m - sin_th * sin_m
    cos_th_m = jnp.where(cos_th > th, cos_th_m, cos_th - mm)
    one_hot = jax.nn.one_hot(labels, weight.shape[0], dtype=cos_th.dtype)
    return (one_hot * cos_th_m + (1.0 - one_hot) * cos_th) * s


if __name__ == "__main__":
    key = jax.random.PRNGKey(0)
    k_x, k_w, k_l = jax.random.split(key, 3)

    B = 8               # batch
    in_features = 32
    out_features = 256  # number of classes
    s_scale, margin = 10.0, 0.2

    x = jax.random.normal(k_x, (B, in_features), dtype=jnp.float32)

    # xavier_normal_ for weight of shape (out_features, in_features)
    xavier_std = math.sqrt(2.0 / (in_features + out_features))
    weight = xavier_std * jax.random.normal(
        k_w, (out_features, in_features), dtype=jnp.float32
    )

    labels = jax.random.randint(k_l, (B,), 0, out_features, dtype=jnp.int32)

    ref = arcface_reference(x, weight, labels, s=s_scale, m=margin)

    # f32 compute path: tight match against the reference.
    out_f32 = arcface_forward_from_weight(
        x, weight, labels, s=s_scale, m=margin, compute_dtype=jnp.float32)
    out_f32 = jax.block_until_ready(out_f32)
    assert out_f32.shape == (B, out_features)
    assert jnp.allclose(out_f32, ref, atol=1e-4, rtol=1e-4), "f32 mismatch vs reference"

    # bf16 (default, fast) path: the prepared weight (f32-normalized -> bf16,
    # K-major transposed, padded) is built ONCE and reused across calls.
    prepared = prepare_arcface_weight(weight, compute_dtype=jnp.bfloat16)
    out_bf16 = arcface_forward(x, labels, prepared, s=s_scale, m=margin)
    out_bf16 = jax.block_until_ready(out_bf16)
    assert out_bf16.shape == (B, out_features)
    assert jnp.allclose(out_bf16, ref, atol=0.15, rtol=0.0), "bf16 mismatch vs reference"

    # Second call reusing the cached prepared weight (no wrapper weight traffic).
    out_bf16_2 = jax.block_until_ready(
        arcface_forward(x, labels, prepared, s=s_scale, m=margin))
    assert jnp.allclose(out_bf16, out_bf16_2), "cached-weight path mismatch"

    print("KERNEL_OK")
</pallas_src>

<mosaic_0001>
module attributes {stable_mosaic.version = 11 : i64} {
  func.func @_arcface_kernel(%arg0: i32, %arg1: memref<8x32xf32, #tpu.memory_space<vmem>>, %arg2: memref<32x256xf32, #tpu.memory_space<vmem>>, %arg3: memref<8x1xi32, #tpu.memory_space<vmem>>, %arg4: memref<8x256xf32, #tpu.memory_space<vmem>>) attributes {dimension_semantics = [#tpu.dimension_semantics<parallel>], iteration_bounds = array<i64: 1>, scalar_prefetch = 0 : i64, scratch_operands = 0 : i64, tpu.core_type = #tpu.core_type<tc>, window_params = [{pipeline_mode = #tpu.pipeline_mode<synchronous>, transform_indices = @transform_0, window_bounds = array<i64: 8, 32>}, {transform_indices = @transform_1, window_bounds = array<i64: 32, 256>}, {pipeline_mode = #tpu.pipeline_mode<synchronous>, transform_indices = @transform_2, window_bounds = array<i64: 8, 1>}, {transform_indices = @transform_3, window_bounds = array<i64: 8, 256>}]} {
    %c0 = arith.constant 0 : index
    %c0_0 = arith.constant 0 : index
    %0 = vector.load %arg1[%c0, %c0_0] : memref<8x32xf32, #tpu.memory_space<vmem>>, vector<8x32xf32>
    %c0_1 = arith.constant 0 : index
    %c0_2 = arith.constant 0 : index
    %1 = vector.load %arg2[%c0_1, %c0_2] : memref<32x256xf32, #tpu.memory_space<vmem>>, vector<32x256xf32>
    %c0_3 = arith.constant 0 : index
    %c0_4 = arith.constant 0 : index
    %2 = vector.load %arg3[%c0_3, %c0_4] : memref<8x1xi32, #tpu.memory_space<vmem>>, vector<8x1xi32>
    %cst = arith.constant dense<0.000000e+00> : vector<8x256xf32>
    %3 = tpu.matmul %0, %1, %cst {dimension_numbers = #tpu.dot_dimension_numbers<[1], [0], [0], [1], [0, 0, 1, 1], [], []>} : vector<8x32xf32>, vector<32x256xf32>, vector<8x256xf32> -> vector<8x256xf32>
    %cst_5 = arith.constant -1.000000e+00 : f32
    %cst_6 = arith.constant 1.000000e+00 : f32
    %4 = vector.broadcast %cst_5 : f32 to vector<8x256xf32>
    %5 = arith.maximumf %4, %3 : vector<8x256xf32>
    %6 = vector.broadcast %cst_6 : f32 to vector<8x256xf32>
    %7 = arith.minimumf %6, %5 : vector<8x256xf32>
    %8 = tpu.iota {dimensions = array<i32: 1>} : vector<8x256xi32>
    %c256_i32 = arith.constant 256 : i32
    %9 = arith.muli %arg0, %c256_i32 : i32
    %10 = vector.broadcast %9 : i32 to vector<8x256xi32>
    %11 = arith.addi %8, %10 : vector<8x256xi32>
    %12 = vector.broadcast %2 : vector<8x1xi32> to vector<8x256xi32>
    %13 = arith.cmpi eq, %12, %11 : vector<8x256xi32>
    %cst_7 = arith.constant 0.000000e+00 : f32
    %14 = vector.broadcast %cst_7 : f32 to vector<8x256xf32>
    %15 = arith.select %13, %7, %14 : vector<8x256xi1>, vector<8x256xf32>
    %cst_8 = arith.constant dense<0.000000e+00> : vector<8xf32>
    %16 = vector.multi_reduction <add>, %15, %cst_8 [1] : vector<8x256xf32> to vector<8xf32>
    %17 = vector.shape_cast %16 : vector<8xf32> to vector<8x1xf32>
    %18 = arith.mulf %17, %17 : vector<8x1xf32>
    %cst_9 = arith.constant 1.000000e+00 : f32
    %19 = vector.broadcast %cst_9 : f32 to vector<8x1xf32>
    %20 = arith.subf %19, %18 : vector<8x1xf32>
    %cst_10 = arith.constant 0.000000e+00 : f32
    %21 = vector.broadcast %cst_10 : f32 to vector<8x1xf32>
    %22 = arith.maximumf %20, %21 : vector<8x1xf32>
    %23 = math.sqrt %22 : vector<8x1xf32>
    %cst_11 = arith.constant 0.980066597 : f32
    %24 = vector.broadcast %cst_11 : f32 to vector<8x1xf32>
    %25 = arith.mulf %17, %24 : vector<8x1xf32>
    %cst_12 = arith.constant 0.198669329 : f32
    %26 = vector.broadcast %cst_12 : f32 to vector<8x1xf32>
    %27 = arith.mulf %23, %26 : vector<8x1xf32>
    %28 = arith.subf %25, %27 : vector<8x1xf32>
    %cst_13 = arith.constant -0.980066597 : f32
    %29 = vector.broadcast %cst_13 : f32 to vector<8x1xf32>
    %30 = arith.cmpf ogt, %17, %29 : vector<8x1xf32>
    %cst_14 = arith.constant 0.0397338644 : f32
    %31 = vector.broadcast %cst_14 : f32 to vector<8x1xf32>
    %32 = arith.subf %17, %31 : vector<8x1xf32>
    %33 = arith.select %30, %28, %32 : vector<8x1xi1>, vector<8x1xf32>
    %34 = vector.shape_cast %33 : vector<8x1xf32> to vector<8x1xf32>
    %35 = vector.broadcast %34 : vector<8x1xf32> to vector<8x256xf32>
    %36 = arith.select %13, %35, %7 : vector<8x256xi1>, vector<8x256xf32>
    %cst_15 = arith.constant 1.000000e+01 : f32
    %37 = vector.broadcast %cst_15 : f32 to vector<8x256xf32>
    %38 = arith.mulf %36, %37 : vector<8x256xf32>
    %c0_16 = arith.constant 0 : index
    %c0_17 = arith.constant 0 : index
    %39 = vector.load %arg4[%c0_16, %c0_17] : memref<8x256xf32, #tpu.memory_space<vmem>>, vector<8x256xf32>
    tpu.vector_store %arg4[%c0_16, %c0_17], %38 {strides = array<i32>} : memref<8x256xf32, #tpu.memory_space<vmem>>, vector<8x256xf32>,
    return
  }
  func.func @transform_0(%arg0: i32) -> (i32, i32) {
    %c0_i32 = arith.constant 0 : i32
    %c0_i32_0 = arith.constant 0 : i32
    %c0_i32_1 = arith.constant 0 : i32
    return %c0_i32, %c0_i32_0 : i32, i32
  }
  func.func @transform_1(%arg0: i32) -> (i32, i32) {
    %c0_i32 = arith.constant 0 : i32
    %c0_i32_0 = arith.constant 0 : i32
    return %c0_i32, %arg0 : i32, i32
  }
  func.func @transform_2(%arg0: i32) -> (i32, i32) {
    %c0_i32 = arith.constant 0 : i32
    %c0_i32_0 = arith.constant 0 : i32
    %c0_i32_1 = arith.constant 0 : i32
    return %c0_i32, %c0_i32_0 : i32, i32
  }
  func.func @transform_3(%arg0: i32) -> (i32, i32) {
    %c0_i32 = arith.constant 0 : i32
    %c0_i32_0 = arith.constant 0 : i32
    return %c0_i32, %arg0 : i32, i32
  }
}

</mosaic_0001>

<llo_original>
// kernel: tpu_custom_call.1
$region0: #{tpu_custom_call.1}
  #allocation0 [shape = 'u32[]', space=smem, size = 0x4, offset = 0x4, fixed_abs, tag = 'smem constant byte address 0x4 - core index']
  #allocation1 [shape = 'u32[72,128]{1,0:T(1,128)}', space=vmem, size = 0x9000, scoped, tag = 'internal scratch']
  %s0 = inlined_call_operand.vmem [shape: f32[8,32], index: 0, kind: input, shape index: {}]
  %s1 = inlined_call_operand.hbm [shape: f32[32,256], index: 1, kind: input, shape index: {}]
  %s2 = inlined_call_operand.vmem [shape: s32[8,1], index: 2, kind: input, shape index: {}]
  %s3 = inlined_call_operand.hbm [shape: f32[8,256], index: 3, kind: output, shape index: {}]
  %s4 = sld [smem:[#allocation0]]
  $region26: #{tpu_custom_call.1} parent=0
    _
  %s6 = ssub.s32 1, %s4
  %s7 = scalar_select 0, %s6, %s4
  $region1: #{tpu_custom_call.1} parent=0
    #allocation2 [shape = 'u8[32768]{0}', space=vmem, size = 0x8000, scoped, tag = 'input window, operand 1, single buffered']
    #allocation3 [shape = 's32[1]{0}', space=sflag, size = 0x4, scoped, tag = 'scoped memory for tpu_custom_call.1']
    #allocation4 [shape = 's32[1]{0}', space=sflag, size = 0x4, scoped, tag = 'scoped memory for tpu_custom_call.1']
    #allocation5 [shape = 'u8[8192]{0}', space=vmem, size = 0x2000, scoped, tag = 'output window, operand 0, single buffered']
    %8 = vsyncpa [#allocation3], 0
    %9 = vsyncpa [#allocation4], 0
    // Predicated region
    $region2: #{tpu_custom_call.1} parent=1 // pred_check
      _
    $region3: #{tpu_custom_call.1} parent=1 // pred_check_branch
      %11 = sbr.rel (0) target = $region5
    $region4: #{tpu_custom_call.1} parent=1 // pred_region
      _
    $region5: #{tpu_custom_call.1} parent=1 // pred_fallthru
      _
    // Predicated region
    $region6: #{tpu_custom_call.1} parent=1 // pred_check
      _
    $region7: #{tpu_custom_call.1} parent=1 // pred_check_branch
      %13 = sbr.rel (0) target = $region9
    $region8: #{tpu_custom_call.1} parent=1 // pred_region
      %15 = vsyncadd [#allocation3], 0
      %s16 = sshll.u32 %s1, 4
      %s17 = int_to_ptr.hbm [resolvable:$true] %s16
      %s18 = sshll.u32 [#allocation2], 4
      %s19 = int_to_ptr.vmem [resolvable:$true] %s18
      %24 = dma.hbm_to_vmem [thread:$0]  %s17, 1024, %s19, [#allocation3], 256, 256, 16
    $region9: #{tpu_custom_call.1} parent=1 // pred_fallthru
      _
    // Predicated region
    $region10: #{tpu_custom_call.1} parent=1 // pred_check
      _
    $region11: #{tpu_custom_call.1} parent=1 // pred_check_branch
      %26 = sbr.rel (0) target = $region13
    $region12: #{tpu_custom_call.1} parent=1 // pred_region
      _
    $region13: #{tpu_custom_call.1} parent=1 // pred_fallthru
      _
    // Predicated region
    $region14: #{tpu_custom_call.1} parent=1 // pred_check
      _
    $region15: #{tpu_custom_call.1} parent=1 // pred_check_branch
      %28 = sbr.rel (0) target = $region17
    $region16: #{tpu_custom_call.1} parent=1 // pred_region
      %30 = dma.done [#allocation3], 1024
    $region17: #{tpu_custom_call.1} parent=1 // pred_fallthru
      _
    %v31 = vld [vmem:[%s0] sm:$0xff]
    %v32 = vld [vmem:[#allocation2] sm:$0xff]
    %v33 = vld [vmem:[#allocation2 + $0x8] sm:$0xff]
    %v34 = vld [vmem:[#allocation2 + $0x10] sm:$0xff]
    %v35 = vld [vmem:[#allocation2 + $0x18] sm:$0xff]
    %v36 = vld [vmem:[#allocation2 + $0x20] sm:$0xff]
    %v37 = vld [vmem:[#allocation2 + $0x28] sm:$0xff]
    %v38 = vld [vmem:[#allocation2 + $0x30] sm:$0xff]
    %v39 = vld [vmem:[#allocation2 + $0x38] sm:$0xff]
    %v40 = vld [vmem:[%s2] sm:$0xff]
    %vm41 = vcmask 261120
    %v43 = vsel %vm41, %v31, 0
    %45 = vmatpush.msra.mxu0 0.0
    %46 = vmatpush.msra.mxu0 0.0
    %47 = vmatpush.msra.mxu0 0.0
    %48 = vmatpush.msra.mxu0 0.0
    %49 = vmatpush.msra.mxu0 0.0
    %50 = vmatpush.msra.mxu0 0.0
    %51 = vmatpush.msra.mxu0 0.0
    %52 = vmatpush.msra.mxu0 0.0
    %53 = vmatpush.msra.mxu0 0.0
    %54 = vmatpush.msra.mxu0 0.0
    %55 = vmatpush.msra.mxu0 0.0
    %56 = vmatpush.msra.mxu0 0.0
    %57 = vmatpush.msra.mxu0 %v38
    %58 = vmatpush.msra.mxu0 %v36
    %59 = vmatpush.msra.mxu0 %v34
    %60 = vmatpush.msra.mxu0 %v32
    %61 = vmatmul.f32.gmra.mxu0 %v43
    %v62 = vpop.f32.mrf.mxu0
    %v63 = vadd.f32 0.0, %v62
    %64 = vdwg.mxu0
    %65 = vmatpush.msra.mxu0 0.0
    %66 = vmatpush.msra.mxu0 0.0
    %67 = vmatpush.msra.mxu0 0.0
    %68 = vmatpush.msra.mxu0 0.0
    %69 = vmatpush.msra.mxu0 0.0
    %70 = vmatpush.msra.mxu0 0.0
    %71 = vmatpush.msra.mxu0 0.0
    %72 = vmatpush.msra.mxu0 0.0
    %73 = vmatpush.msra.mxu0 0.0
    %74 = vmatpush.msra.mxu0 0.0
    %75 = vmatpush.msra.mxu0 0.0
    %76 = vmatpush.msra.mxu0 0.0
    %77 = vmatpush.msra.mxu0 %v39
    %78 = vmatpush.msra.mxu0 %v37
    %79 = vmatpush.msra.mxu0 %v35
    %80 = vmatpush.msra.mxu0 %v33
    %81 = vmatmul.f32.gmra.mxu0 %v43
    %v82 = vpop.f32.mrf.mxu0
    %v83 = vadd.f32 0.0, %v82
    %84 = vdwg.mxu0
    %v85 = vmax.f32 %v63, -1.0
    %v86 = vmax.f32 %v83, -1.0
    %v87 = vmin.f32 %v85, 1.0
    %v88 = vmin.f32 %v86, 1.0
    %v89 = vlaneseq
    %v90 = vand.u32 %v89, 127
    %v91 = vadd.s32 %v90, 128
    %s92 = smul.u32 0, 256
    %v93 = vstv %s92
    %v94 = vadd.s32 %v90, %v93
    %v95 = vadd.s32 %v91, %v93
    %96 = vset.pattern.permute.xlu0 0
    %97 = vperm.xlu0 %96, %v40
    %v98 = vpop.permute.xlu0 %97
    %vm99 = vcmp.eq.s32.totalorder %v98, %v94
    %vm100 = vcmp.eq.s32.totalorder %v98, %v95
    %v101 = vsel %vm99, %v87, 0.0
    %v102 = vsel %vm100, %v88, 0.0
    %v103 = vadd.f32 %v101, %v102
    %104 = vadd.xlane.f32.xlu0 %v103
    %v105 = vpop.xlane.xlu0 %104
    %v106 = vmul.f32 %v105, %v105
    %v107 = vsub.f32 1.0, %v106
    %v108 = vmax.f32 %v107, 0.0
    %v109 = vrsqrt.pop %v108
    %v110 = vmul.f32 %v109, %v108
    %v111 = vmul.f32 %v110, %v109
    %v112 = vmul.f32 0.5, %v111
    %v113 = vsub.f32 1.5, %v112
    %v114 = vmul.f32 %v109, %v113
    %v115 = vmul.f32 %v108, %v114
    %vm116 = vcmp.eq.f32.partialorder %v108, inf
    %v117 = vsel %vm116, %v108, %v115
    %vm118 = vcmp.eq.f32.partialorder %v108, 0.0
    %v119 = vand.u32 %v108, 2147483648
    %v120 = vsel %vm118, %v119, %v117
    %v121 = vmul.f32 %v105, 0.9800666
    %v122 = vmul.f32 %v120, 0.19866933
    %v123 = vsub.f32 %v121, %v122
    %vm124 = vcmp.gt.f32.partialorder %v105, -0.9800666
    %v125 = vsub.f32 %v105, 0.039733864
    %v126 = vsel %vm124, %v123, %v125
    %v127 = vsel %vm99, %v126, %v87
    %v128 = vsel %vm100, %v126, %v88
    %v129 = vmul.f32 %v127, 10.0
    %v130 = vmul.f32 %v128, 10.0
    %131 = vst [vmem:[#allocation5] sm:$0xff] %v129
    %132 = vst [vmem:[#allocation5 + $0x8] sm:$0xff] %v130
    // Predicated region
    $region18: #{tpu_custom_call.1} parent=1 // pred_check
      _
    $region19: #{tpu_custom_call.1} parent=1 // pred_check_branch
      %134 = sbr.rel (0) target = $region21
    $region20: #{tpu_custom_call.1} parent=1 // pred_region
      %136 = vsyncadd [#allocation4], 0
      %s138 = sshll.u32 [#allocation5], 4
      %s139 = int_to_ptr.vmem [resolvable:$true] %s138
      %s140 = sshll.u32 %s3, 4
      %s141 = int_to_ptr.hbm [resolvable:$true] %s140
      %143 = dma.vmem_to_hbm [thread:$0]  %s139, 256, %s141, [#allocation4]
    $region21: #{tpu_custom_call.1} parent=1 // pred_fallthru
      _
    // Predicated region
    $region22: #{tpu_custom_call.1} parent=1 // pred_check
      _
    $region23: #{tpu_custom_call.1} parent=1 // pred_check_branch
      %145 = sbr.rel (0) target = $region25
    $region24: #{tpu_custom_call.1} parent=1 // pred_region
      %147 = dma.done [#allocation4], 256
    $region25: #{tpu_custom_call.1} parent=1 // pred_fallthru
      _
    %148 = vsyncpa [#allocation3], 1
    %149 = vsyncpa [#allocation4], 1

</llo_original>
